<compile_context>
chip_gen: v7x
topology: tpu7x:2x2x1
jax: 0.10.0
libtpu: 0.0.40
codegen_flags: <defaults>
</compile_context>

<pallas_src>
import functools
import math

import numpy as np
import jax
import jax.numpy as jnp
from jax.experimental import pallas as pl
from jax.experimental.pallas import tpu as pltpu


def _fourier_kernel(x_ref, out_ref, *, freqs, num_channels, use_doubling,
                    compute_dtype):
    """x_ref: (1, C, hw_tile); out_ref: (1, 2*F*C, hw_tile).

    Output row layout matches torch.cat([sin, cos], dim=1) of the flattened
    (F, C) axis: sin(freq_f) occupies rows [f*C, (f+1)*C), cos(freq_f) occupies
    rows [F*C + f*C, F*C + (f+1)*C).
    """
    C = num_channels
    F = len(freqs)
    x = x_ref[0].astype(compute_dtype)                         # (C, hw_tile)

    if use_doubling:
        # freqs[i+1] == 2 * freqs[i]  (unit exponent step): one sincos for the
        # base frequency, angle-doubling for the rest (pure VPU mul/adds).
        phase = x * jnp.asarray(freqs[0], dtype=compute_dtype)
        s = jnp.sin(phase)
        c = jnp.cos(phase)
        for f_idx in range(F):
            out_ref[0, f_idx * C:(f_idx + 1) * C, :] = s.astype(out_ref.dtype)
            out_ref[0, F * C + f_idx * C:F * C + (f_idx + 1) * C, :] = (
                c.astype(out_ref.dtype))
            if f_idx + 1 < F:
                s, c = 2.0 * s * c, 1.0 - 2.0 * s * s
    else:
        for f_idx, f in enumerate(freqs):
            phase = x * jnp.asarray(f, dtype=compute_dtype)
            out_ref[0, f_idx * C:(f_idx + 1) * C, :] = (
                jnp.sin(phase).astype(out_ref.dtype))
            out_ref[0, F * C + f_idx * C:F * C + (f_idx + 1) * C, :] = (
                jnp.cos(phase).astype(out_ref.dtype))


def _vmem_capacity_bytes():
    try:
        info = pltpu.get_tpu_info()
        cap = getattr(info, "vmem_capacity_bytes", None)
        if cap:
            return int(cap)
    except Exception:
        pass
    return 64 << 20  # conservative (v7x-sized) default


def _pick_hw_tile(hw_pad, max_elems):
    """Largest multiple of 128 that divides hw_pad and is <= max_elems (>=128).
    hw_pad is guaranteed to be a multiple of 128, so 128 always qualifies."""
    max_elems = max(128, min(max_elems, hw_pad))
    t = (max_elems // 128) * 128
    while t >= 128:
        if hw_pad % t == 0:
            return t
        t -= 128
    return 128


def fourier_features(x, first=7.0, last=8.0, step=1.0):
    """Pallas implementation of FourierFeatures.forward for 4-D NCHW input."""
    N, C, H, W = x.shape

    # Frequencies in float32, exactly as the reference computes them
    # (2**e and *2 are exact powers of two, * pi rounded once to f32).
    exps32 = np.arange(first, last + 1e-8, step).astype(np.float32)
    freqs32 = (np.float32(2.0) ** exps32) * np.float32(2.0) * np.float32(math.pi)
    freqs = tuple(float(f) for f in freqs32)
    F = len(freqs)
    use_doubling = F >= 2 and abs(float(step) - 1.0) < 1e-12

    HW = H * W
    HW_pad = ((HW + 127) // 128) * 128
    x_flat = x.reshape(N, C, HW)                 # metadata-only reshape
    if HW_pad != HW:
        x_flat = jnp.pad(x_flat, ((0, 0), (0, 0), (0, HW_pad - HW)))

    itemsize = x.dtype.itemsize
    vmem_cap = _vmem_capacity_bytes()
    # ~2 MiB input tiles on 128 MiB-VMEM parts (v5e/v6e); ~1 MiB on v7x (64 MiB).
    target_bytes = (2 << 20) if vmem_cap >= (100 << 20) else (1 << 20)
    hw_tile = _pick_hw_tile(HW_pad, target_bytes // max(1, C * itemsize))
    # Ensure >= 2 blocks on a 'parallel' axis so both v7x TensorCores get work.
    if N == 1 and HW_pad // hw_tile < 2 and HW_pad >= 256:
        hw_tile = _pick_hw_tile(HW_pad, HW_pad // 2)
    n_hw = HW_pad // hw_tile

    compute_dtype = (
        jnp.float32 if x.dtype in (jnp.bfloat16, jnp.float16) else x.dtype
    )

    # Double-buffered input + output tiles, plus headroom for internal scratch.
    in_tile_bytes = C * hw_tile * itemsize
    out_tile_bytes = 2 * F * C * hw_tile * itemsize
    vmem_limit = int(min(2 * (in_tile_bytes + out_tile_bytes) + (8 << 20),
                         vmem_cap // 2))

    n_elem = N * C * HW
    cost = pl.CostEstimate(
        flops=int(n_elem * (1 + 5 * max(0, F - 1))),
        transcendentals=int((2 if use_doubling else 2 * F) * n_elem),
        bytes_accessed=int((1 + 2 * F) * n_elem * itemsize),
    )

    out = pl.pallas_call(
        functools.partial(
            _fourier_kernel, freqs=freqs, num_channels=C,
            use_doubling=use_doubling, compute_dtype=compute_dtype),
        out_shape=jax.ShapeDtypeStruct((N, 2 * F * C, HW_pad), x.dtype),
        grid=(N, n_hw),
        in_specs=[pl.BlockSpec((1, C, hw_tile), lambda n, s: (n, 0, s))],
        out_specs=pl.BlockSpec((1, 2 * F * C, hw_tile), lambda n, s: (n, 0, s)),
        compiler_params=pltpu.CompilerParams(
            dimension_semantics=("parallel", "parallel"),
            vmem_limit_bytes=vmem_limit,
        ),
        cost_estimate=cost,
    )(x_flat)

    if HW_pad != HW:
        out = out[:, :, :HW]
    # (N, 2*F*C, HW) -> (N, 2*F*C, H, W): metadata-only, order already matches
    # torch.cat([sin, cos], dim=1) of features.flatten(1, 2).
    return out.reshape(N, 2 * F * C, H, W)


def _reference(x, first=7.0, last=8.0, step=1.0):
    exps = jnp.asarray(np.arange(first, last + 1e-8, step), dtype=x.dtype)
    freqs = 2.0 ** exps * 2.0 * jnp.pi                        # (F,)
    feats = freqs[None, :, None, None, None] * x[:, None]     # (N,F,C,H,W)
    n, f, c, h, w = feats.shape
    feats = feats.reshape(n, f * c, h, w)
    return jnp.concatenate([jnp.sin(feats), jnp.cos(feats)], axis=1)


if __name__ == "__main__":
    key = jax.random.PRNGKey(0)
    N, C, H, W = 2, 4, 16, 16
    x = jax.random.normal(key, (N, C, H, W), dtype=jnp.float32)

    y = jax.block_until_ready(fourier_features(x))
    assert y.shape == (N, 2 * 2 * C, H, W), y.shape

    y_ref = _reference(x)
    # Tolerance note: phases reach ~2^8*2*pi*|x| ~= 5e3; at that magnitude f32
    # sin/cos are range-reduction limited and the angle-doubling recurrence adds
    # a few extra ULPs, so 1e-4 is the honest comparison scale (expected
    # agreement is ~1e-6; any real layout/scaling bug is O(1) and still caught).
    np.testing.assert_allclose(np.asarray(y), np.asarray(y_ref),
                               atol=1e-4, rtol=1e-4)

    print("KERNEL_OK")
</pallas_src>

<mosaic_0001>
module attributes {stable_mosaic.version = 11 : i64} {
  func.func @_fourier_kernel(%arg0: i32, %arg1: i32, %arg2: memref<1x4x256xf32, #tpu.memory_space<vmem>>, %arg3: memref<1x16x256xf32, #tpu.memory_space<vmem>>) attributes {dimension_semantics = [#tpu.dimension_semantics<parallel>, #tpu.dimension_semantics<parallel>], iteration_bounds = array<i64: 2, 1>, scalar_prefetch = 0 : i64, scratch_operands = 0 : i64, tpu.core_type = #tpu.core_type<tc>, window_params = [{transform_indices = @transform_0, window_bounds = array<i64: 1, 4, 256>}, {transform_indices = @transform_1, window_bounds = array<i64: 1, 16, 256>}]} {
    %c0 = arith.constant 0 : index
    %c0_0 = arith.constant 0 : index
    %c0_1 = arith.constant 0 : index
    %0 = vector.load %arg2[%c0, %c0_0, %c0_1] : memref<1x4x256xf32, #tpu.memory_space<vmem>>, vector<1x4x256xf32>
    %1 = vector.shape_cast %0 : vector<1x4x256xf32> to vector<4x256xf32>
    %cst = arith.constant 804.247741 : f32
    %2 = vector.broadcast %cst : f32 to vector<4x256xf32>
    %3 = arith.mulf %1, %2 : vector<4x256xf32>
    %4 = math.sin %3 : vector<4x256xf32>
    %5 = math.cos %3 : vector<4x256xf32>
    %c0_2 = arith.constant 0 : index
    %c0_3 = arith.constant 0 : index
    %c0_4 = arith.constant 0 : index
    %6 = vector.load %arg3[%c0_2, %c0_3, %c0_4] : memref<1x16x256xf32, #tpu.memory_space<vmem>>, vector<1x4x256xf32>
    %7 = vector.shape_cast %6 : vector<1x4x256xf32> to vector<4x256xf32>
    %8 = vector.shape_cast %4 : vector<4x256xf32> to vector<1x4x256xf32>
    tpu.vector_store %arg3[%c0_2, %c0_3, %c0_4], %8 {strides = array<i32>} : memref<1x16x256xf32, #tpu.memory_space<vmem>>, vector<1x4x256xf32>,
    %c0_5 = arith.constant 0 : index
    %c8 = arith.constant 8 : index
    %c0_6 = arith.constant 0 : index
    %9 = vector.load %arg3[%c0_5, %c8, %c0_6] : memref<1x16x256xf32, #tpu.memory_space<vmem>>, vector<1x4x256xf32>
    %10 = vector.shape_cast %9 : vector<1x4x256xf32> to vector<4x256xf32>
    %11 = vector.shape_cast %5 : vector<4x256xf32> to vector<1x4x256xf32>
    tpu.vector_store %arg3[%c0_5, %c8, %c0_6], %11 {strides = array<i32>} : memref<1x16x256xf32, #tpu.memory_space<vmem>>, vector<1x4x256xf32>,
    %cst_7 = arith.constant 2.000000e+00 : f32
    %12 = vector.broadcast %cst_7 : f32 to vector<4x256xf32>
    %13 = arith.mulf %12, %4 : vector<4x256xf32>
    %14 = arith.mulf %13, %5 : vector<4x256xf32>
    %cst_8 = arith.constant 2.000000e+00 : f32
    %15 = vector.broadcast %cst_8 : f32 to vector<4x256xf32>
    %16 = arith.mulf %15, %4 : vector<4x256xf32>
    %17 = arith.mulf %16, %4 : vector<4x256xf32>
    %cst_9 = arith.constant 1.000000e+00 : f32
    %18 = vector.broadcast %cst_9 : f32 to vector<4x256xf32>
    %19 = arith.subf %18, %17 : vector<4x256xf32>
    %c0_10 = arith.constant 0 : index
    %c4 = arith.constant 4 : index
    %c0_11 = arith.constant 0 : index
    %20 = vector.load %arg3[%c0_10, %c4, %c0_11] : memref<1x16x256xf32, #tpu.memory_space<vmem>>, vector<1x4x256xf32>
    %21 = vector.shape_cast %20 : vector<1x4x256xf32> to vector<4x256xf32>
    %22 = vector.shape_cast %14 : vector<4x256xf32> to vector<1x4x256xf32>
    tpu.vector_store %arg3[%c0_10, %c4, %c0_11], %22 {strides = array<i32>} : memref<1x16x256xf32, #tpu.memory_space<vmem>>, vector<1x4x256xf32>,
    %c0_12 = arith.constant 0 : index
    %c12 = arith.constant 12 : index
    %c0_13 = arith.constant 0 : index
    %23 = vector.load %arg3[%c0_12, %c12, %c0_13] : memref<1x16x256xf32, #tpu.memory_space<vmem>>, vector<1x4x256xf32>
    %24 = vector.shape_cast %23 : vector<1x4x256xf32> to vector<4x256xf32>
    %25 = vector.shape_cast %19 : vector<4x256xf32> to vector<1x4x256xf32>
    tpu.vector_store %arg3[%c0_12, %c12, %c0_13], %25 {strides = array<i32>} : memref<1x16x256xf32, #tpu.memory_space<vmem>>, vector<1x4x256xf32>,
    return
  }
  func.func @transform_0(%arg0: i32, %arg1: i32) -> (i32, i32, i32) {
    %c0_i32 = arith.constant 0 : i32
    %c0_i32_0 = arith.constant 0 : i32
    return %arg0, %c0_i32, %arg1 : i32, i32, i32
  }
  func.func @transform_1(%arg0: i32, %arg1: i32) -> (i32, i32, i32) {
    %c0_i32 = arith.constant 0 : i32
    %c0_i32_0 = arith.constant 0 : i32
    return %arg0, %c0_i32, %arg1 : i32, i32, i32
  }
}

</mosaic_0001>

<llo_original>
// kernel: tpu_custom_call.1
$region0: #{tpu_custom_call.1}
  #allocation0 [shape = 'u32[]', space=smem, size = 0x4, offset = 0x4, fixed_abs, tag = 'smem constant byte address 0x4 - core index']
  #allocation1 [shape = 'u32[144,128]{1,0:T(1,128)}', space=vmem, size = 0x12000, scoped, tag = 'internal scratch']
  %s0 = inlined_call_operand.hbm [shape: f32[2,4,256], index: 0, kind: input, shape index: {}]
  %s1 = inlined_call_operand.hbm [shape: f32[2,16,256], index: 1, kind: output, shape index: {}]
  %s2 = sld [smem:[#allocation0]]
  $region41: #{tpu_custom_call.1} parent=0
    _
  %s4 = ssub.s32 1, %s2
  %s5 = scalar_select 0, %s4, %s2
  $region1: #{tpu_custom_call.1} parent=0
    #allocation2 [shape = 'u8[8192]{0}', space=vmem, size = 0x2000, scoped, tag = 'input window, operand 0']
    #allocation3 [shape = 's32[2]{0}', space=sflag, size = 0x8, scoped, tag = 'scoped memory for tpu_custom_call.1']
    #allocation4 [shape = 's32[2]{0}', space=sflag, size = 0x8, scoped, tag = 'scoped memory for tpu_custom_call.1']
    #allocation5 [shape = 'u8[32768]{0}', space=vmem, size = 0x8000, scoped, tag = 'output window, operand 0']
    %6 = vsyncpa [#allocation3], 0
    %s7 = scalar_lea.sflag [#allocation3], 1
    %8 = vsyncpa %s7, 0
    %9 = vsyncpa [#allocation4], 0
    %s10 = scalar_lea.sflag [#allocation4], 1
    %11 = vsyncpa %s10, 0
    loop: start=0, step=1, limit=4
    $region2: #{tpu_custom_call.1} parent=1 // loop_pre_header
      _
    $region3: #{tpu_custom_call.1} parent=1 // loop_header
      %s13 = sphi 0, %s17
      %p14 = scmp.ge.s32.totalorder %s13, 4
      %s20 = sphi 0, %s32
      %s21 = sphi 0, %s28
      %s22 = sphi 0, %s20
      %s23 = sphi 0, %s21
      %s24 = sphi 0, %s22
      %s25 = sphi 0, %s23
      %s37 = sphi 0, %s39
      %s40 = sphi 0, %s37
      %s41 = sphi 0, %s40
      %s57 = sphi 0, %s41
      %s65 = sphi 0, %s67
      %s68 = sphi 0, %s65
      %s69 = sphi 0, %s68
      %s85 = sphi 0, %s69
    $region4: #{tpu_custom_call.1} parent=1 // loop_header_branch
      %16 = sbr.rel (%p14) target = $region8
    $region5: #{tpu_custom_call.1} parent=1 // loop_body
      %s18 = ssub.s32 %s13, 1
      %s19 = ssub.s32 %s13, 2
      %s26 = sadd.s32 1, %s21
      %p27 = scmp.ge.s32.totalorder %s26, 1
      %s28 = scalar_select %p27, 0, %s26
      %s29 = sadd.s32 1, %s20
      %s30 = scalar_select %p27, %s29, %s20
      %p31 = scmp.ge.s32.totalorder %s30, 2
      %s32 = scalar_select %p31, 0, %s30
      %s33 = ssub.s32 %s20, %s32
      %s34 = ssub.s32 %s21, %s28
      %s35 = sor.u32 %s33, %s34
      %p36 = scmp.eq.s32.totalorder %s35, 0
      %s38 = sadd.s32 %s37, 1
      %s39 = scalar_select %p36, %s37, %s38
      %p42 = pneg %p36
      %p43 = scmp.eq.s32.totalorder %s13, 1
      %p44 = por %p42, %p43
      %p45 = scmp.ne.s32.totalorder %s37, %s40
      %p46 = scmp.eq.s32.totalorder %s13, 0
      %p47 = por %p45, %p46
      %p48 = scmp.ne.s32.totalorder %s37, %s40
      %p49 = scmp.eq.s32.totalorder %s18, 1
      %p50 = por %p48, %p49
      %p51 = scmp.ne.s32.totalorder %s40, %s41
      %p52 = scmp.eq.s32.totalorder %s18, 0
      %p53 = por %p51, %p52
      %p54 = scmp.ne.s32.totalorder %s40, %s41
      %p55 = scmp.eq.s32.totalorder %s19, 1
      %p56 = por %p54, %p55
      %p58 = scmp.ne.s32.totalorder %s41, %s57
      %p59 = scmp.eq.s32.totalorder %s19, 0
      %p60 = por %p58, %p59
      %s61 = ssub.s32 %s20, %s32
      %s62 = ssub.s32 %s21, %s28
      %s63 = sor.u32 %s61, %s62
      %p64 = scmp.eq.s32.totalorder %s63, 0
      %s66 = sadd.s32 %s65, 1
      %s67 = scalar_select %p64, %s65, %s66
      %p70 = pneg %p64
      %p71 = scmp.eq.s32.totalorder %s13, 1
      %p72 = por %p70, %p71
      %p73 = scmp.ne.s32.totalorder %s65, %s68
      %p74 = scmp.eq.s32.totalorder %s13, 0
      %p75 = por %p73, %p74
      %p76 = scmp.ne.s32.totalorder %s65, %s68
      %p77 = scmp.eq.s32.totalorder %s18, 1
      %p78 = por %p76, %p77
      %p79 = scmp.ne.s32.totalorder %s68, %s69
      %p80 = scmp.eq.s32.totalorder %s18, 0
      %p81 = por %p79, %p80
      %p82 = scmp.ne.s32.totalorder %s68, %s69
      %p83 = scmp.eq.s32.totalorder %s19, 1
      %p84 = por %p82, %p83
      %p86 = scmp.ne.s32.totalorder %s69, %s85
      %p87 = scmp.eq.s32.totalorder %s19, 0
      %p88 = por %p86, %p87
      %p89 = scmp.le.s32.totalorder 1, %s13
      %p90 = scmp.lt.s32.totalorder %s13, 3
      %p91 = pnand %p89, %p90
      %p92 = pneg %p91
      // Predicated region
      $region9: #{tpu_custom_call.1} parent=5 // pred_check
        _
      $region10: #{tpu_custom_call.1} parent=5 // pred_check_branch
        %94 = sbr.rel (%p91) target = $region12
      $region11: #{tpu_custom_call.1} parent=5 // pred_region
        %s95 = ssub.s32 %s13, 1
      $region12: #{tpu_custom_call.1} parent=5 // pred_fallthru
        _
      %p96 = scmp.lt.s32.totalorder %s13, 2
      // Predicated region
      $region13: #{tpu_custom_call.1} parent=5 // pred_check
        %p97 = pneg %p96
      $region14: #{tpu_custom_call.1} parent=5 // pred_check_branch
        %99 = sbr.rel (%p97) target = $region16
      $region15: #{tpu_custom_call.1} parent=5 // pred_region
        // Predicated region
        $region17: #{tpu_custom_call.1} parent=15 // pred_check
          %p100 = pneg %p47
        $region18: #{tpu_custom_call.1} parent=15 // pred_check_branch
          %102 = sbr.rel (%p100) target = $region20
        $region19: #{tpu_custom_call.1} parent=15 // pred_region
          %s103 = sand.u32 %s37, 1
          %s104 = scalar_lea.sflag [#allocation3], %s103
          %s105 = sand.u32 %s37, 1
          %s106 = smul.addr %s105, 8
          %s107 = scalar_lea.vmem [#allocation2], %s106
          %s108 = smul.u32 2, %s21
          %s110 = ssub.s32 128, 128
          %111 = vsyncadd %s104, %s110
          %s112 = smul.addr %s20, 2
          %s113 = sadd.s32 %s108, %s112
          %s114 = smul.addr %s113, 64
          %s115 = scalar_lea.hbm %s0, %s114
          %s117 = sshll.u32 %s107, 4
          %s118 = int_to_ptr.vmem [resolvable:$true] %s117
          %120 = dma.hbm_to_vmem [thread:$0]  %s115, 128, %s118, %s104
        $region20: #{tpu_custom_call.1} parent=15 // pred_fallthru
          _
      $region16: #{tpu_custom_call.1} parent=5 // pred_fallthru
        _
      %p121 = scmp.le.s32.totalorder 1, %s13
      %p122 = scmp.lt.s32.totalorder %s13, 3
      %p123 = pnand %p121, %p122
      %p124 = pneg %p123
      // Predicated region
      $region21: #{tpu_custom_call.1} parent=5 // pred_check
        _
      $region22: #{tpu_custom_call.1} parent=5 // pred_check_branch
        %126 = sbr.rel (%p123) target = $region24
      $region23: #{tpu_custom_call.1} parent=5 // pred_region
        %s127 = ssub.s32 %s13, 1
        %s128 = sand.u32 %s40, 1
        %s129 = scalar_lea.sflag [#allocation3], %s128
        %s130 = sand.u32 %s40, 1
        %s131 = smul.addr %s130, 8
        %s132 = scalar_lea.vmem [#allocation2], %s131
        // Predicated region
        $region25: #{tpu_custom_call.1} parent=23 // pred_check
          %p133 = pneg %p53
        $region26: #{tpu_custom_call.1} parent=23 // pred_check_branch
          %135 = sbr.rel (%p133) target = $region28
        $region27: #{tpu_custom_call.1} parent=23 // pred_region
          %136 = dma.done %s129, 128
        $region28: #{tpu_custom_call.1} parent=23 // pred_fallthru
          _
        %s137 = sand.u32 %s40, 1
        %s138 = scalar_lea.sflag [#allocation3], %s137
        %s139 = sand.u32 %s40, 1
        %s140 = smul.addr %s139, 8
        %s141 = scalar_lea.vmem [#allocation2], %s140
        %p142 = pneg %p53
        %p143 = pneg %p50
        %p144 = pneg %p81
        %p145 = pneg %p78
        %s146 = sand.u32 %s68, 1
        %s147 = scalar_lea.sflag [#allocation4], %s146
        %s148 = sand.u32 %s68, 1
        %s149 = smul.addr %s148, 32
        %s150 = scalar_lea.vmem [#allocation5], %s149
        %s151 = smul.u32 2, %s23
        %s152 = smul.u32 2, %s23
        %v153 = vld [vmem:[%s132] sm:$0xff]
        %v154 = vmul.f32 %v153, 804.24774
        %v155 = vand.u32 2147483647, %v154
        %vm156 = vcmp.le.f32.partialorder %v155, 0.7853982
        %vm157 = vcmp.lt.s32.totalorder %v154, 0
        %v158 = vand.u32 %v154, 2139095040
        %v159 = vshrl.u32 %v158, 23
        %v160 = vsub.s32 %v159, 127
        %v161 = vand.u32 2147483647, %v154
        %v162 = vand.u32 %v161, 8388607
        %v163 = vor.u32 %v162, 8388608
        %v164 = vsub.s32 0, %v163
        %v165 = vadd.s32 %v160, 1
        %vm166 = vcmp.gt.s32.totalorder %v165, 0
        %v167 = vsel %vm166, %v165, 0
        %v168 = vshrl.u32 %v167, 5
        %v169 = vand.u32 %v167, 31
        %v170 = vsub.s32 32, %v169
        %v171 = vshrl.u32 683565275, %v170
        %v172 = vshll.u32 683565275, %v169
        %v173 = vshrl.u32 2475754826, %v170
        %v174 = vor.u32 %v172, %v173
        %v175 = vshll.u32 2475754826, %v169
        %v176 = vshrl.u32 2131351028, %v170
        %v177 = vor.u32 %v175, %v176
        %v178 = vshll.u32 2131351028, %v169
        %v179 = vshrl.u32 2102212464, %v170
        %v180 = vor.u32 %v178, %v179
        %v181 = vshll.u32 2102212464, %v169
        %v182 = vshrl.u32 920167782, %v170
        %v183 = vor.u32 %v181, %v182
        %v184 = vshll.u32 920167782, %v169
        %v185 = vshrl.u32 1326507024, %v170
        %v186 = vor.u32 %v184, %v185
        %vm187 = vcmp.lt.s32.totalorder %v168, 1
        %vm188 = vcmp.lt.s32.totalorder %v168, 2
        %vm189 = vcmp.lt.s32.totalorder %v168, 3
        %vm190 = vcmp.lt.s32.totalorder %v168, 4
        %v191 = vsel %vm187, %v171, %v174
        %v192 = vsel %vm190, %v180, 2102212464
        %v193 = vsel %vm189, %v177, %v192
        %v194 = vsel %vm188, %v191, %v193
        %v195 = vsel %vm187, %v174, %v177
        %v196 = vsel %vm190, %v183, 920167782
        %v197 = vsel %vm189, %v180, %v196
        %v198 = vsel %vm188, %v195, %v197
        %v199 = vsel %vm187, %v177, %v180
        %v200 = vsel %vm190, %v186, 1326507024
        %v201 = vsel %vm189, %v183, %v200
        %v202 = vsel %vm188, %v199, %v201
        %v203 = vshll.u32 %v163, 8
        %v204 = vmul.u32.u64.compose %v203, %v202
        %v205 = vextract.low.u32 %v204
        %v206 = vextract.high.u32 %v204
        %v207 = vmul.u32.u64.compose %v203, %v198
        %v208 = vextract.low.u32 %v207
        %v209 = vextract.high.u32 %v207
        %v210 = vmul.u32 %v203, %v194
        %v211 = vadd.s32 %v206, %v208
        %vm212 = vc.u32 %v206, %v208
        %v213 = vadd.s32 %v209, 1
        %v214 = vsel %vm212, %v213, %v209
        %v215 = vadd.s32 %v210, %v214
        %v216 = vadd.s32 %v215, 536870912
        %v217 = vshrl.u32 %v216, 30
        %v218 = vshll.u32 %v217, 30
        %v219 = vsub.s32 %v215, %v218
        %vm220 = vcmp.lt.s32.totalorder %v219, 0
        %v221 = vsub.s32 0, %v219
        %v222 = vsel %vm220, %v221, %v219
        %v223 = vclz %v222
        %v224 = vsub.s32 %v223, 2
        %vm225 = vcmp.gt.s32.totalorder 0, %v224
        %v226 = vsel %vm225, 0, %v224
        %v227 = vsub.s32 32, %v226
        %v228 = vshll.u32 %v219, %v226
        %v229 = vshrl.u32 %v211, %v227
        %v230 = vor.u32 %v228, %v229
        %v231 = vsub.s32 4294967266, %v226
        %v232 = vadd.s32 %v231, 127
        %v233 = vshll.u32 %v232, 23
        %v234 = vor.u32 4788187, %v233
        %v235 = vand.u32 2147483647, %v234
        %v237 = vcvt.s32.f32 %v230
        %v238 = vmul.f32 %v237, %v235
        %v239 = vxor.u32 %v238, 2147483648
        %v240 = vsel %vm157, %v239, %v238
        %v241 = vsub.s32 4, %v217
        %v242 = vsel %vm157, %v241, %v217
        %v243 = vsel %vm156, %v154, %v240
        %v244 = vsel %vm156, 0, %v242
        %v245 = vcosq.f32.pop %v243
        %v246 = vsinq.f32.pop %v243
        %vm247 = vweird.f32 %v154
        %v248 = vadd.s32 %v244, 3
        %v249 = vand.u32 %v248, 3
        %vm250 = vcmp.lt.s32.totalorder %v249, 2
        %vm251 = vcmp.eq.s32.totalorder %v249, 0
        %v252 = vxor.u32 %v246, 2147483648
        %v253 = vsel %vm251, %v245, %v252
        %vm254 = vcmp.eq.s32.totalorder %v249, 2
        %v255 = vxor.u32 %v245, 2147483648
        %v256 = vsel %vm254, %v255, %v246
        %v257 = vsel %vm250, %v253, %v256
        %v258 = vsel %vm247, nan, %v257
        %v259 = vand.u32 2147483647, %v154
        %vm260 = vcmp.le.f32.partialorder %v259, 0.7853982
        %vm261 = vcmp.lt.s32.totalorder %v154, 0
        %v262 = vand.u32 %v154, 2139095040
        %v263 = vshrl.u32 %v262, 23
        %v264 = vsub.s32 %v263, 127
        %v265 = vand.u32 2147483647, %v154
        %v266 = vand.u32 %v265, 8388607
        %v267 = vor.u32 %v266, 8388608
        %v268 = vsub.s32 0, %v267
        %v269 = vadd.s32 %v264, 1
        %vm270 = vcmp.gt.s32.totalorder %v269, 0
        %v271 = vsel %vm270, %v269, 0
        %v272 = vshrl.u32 %v271, 5
        %v273 = vand.u32 %v271, 31
        %v274 = vsub.s32 32, %v273
        %v275 = vshrl.u32 683565275, %v274
        %v276 = vshll.u32 683565275, %v273
        %v277 = vshrl.u32 2475754826, %v274
        %v278 = vor.u32 %v276, %v277
        %v279 = vshll.u32 2475754826, %v273
        %v280 = vshrl.u32 2131351028, %v274
        %v281 = vor.u32 %v279, %v280
        %v282 = vshll.u32 2131351028, %v273
        %v283 = vshrl.u32 2102212464, %v274
        %v284 = vor.u32 %v282, %v283
        %v285 = vshll.u32 2102212464, %v273
        %v286 = vshrl.u32 920167782, %v274
        %v287 = vor.u32 %v285, %v286
        %v288 = vshll.u32 920167782, %v273
        %v289 = vshrl.u32 1326507024, %v274
        %v290 = vor.u32 %v288, %v289
        %vm291 = vcmp.lt.s32.totalorder %v272, 1
        %vm292 = vcmp.lt.s32.totalorder %v272, 2
        %vm293 = vcmp.lt.s32.totalorder %v272, 3
        %vm294 = vcmp.lt.s32.totalorder %v272, 4
        %v295 = vsel %vm291, %v275, %v278
        %v296 = vsel %vm294, %v284, 2102212464
        %v297 = vsel %vm293, %v281, %v296
        %v298 = vsel %vm292, %v295, %v297
        %v299 = vsel %vm291, %v278, %v281
        %v300 = vsel %vm294, %v287, 920167782
        %v301 = vsel %vm293, %v284, %v300
        %v302 = vsel %vm292, %v299, %v301
        %v303 = vsel %vm291, %v281, %v284
        %v304 = vsel %vm294, %v290, 1326507024
        %v305 = vsel %vm293, %v287, %v304
        %v306 = vsel %vm292, %v303, %v305
        %v307 = vshll.u32 %v267, 8
        %v308 = vmul.u32.u64.compose %v307, %v306
        %v309 = vextract.low.u32 %v308
        %v310 = vextract.high.u32 %v308
        %v311 = vmul.u32.u64.compose %v307, %v302
        %v312 = vextract.low.u32 %v311
        %v313 = vextract.high.u32 %v311
        %v314 = vmul.u32 %v307, %v298
        %v315 = vadd.s32 %v310, %v312
        %vm316 = vc.u32 %v310, %v312
        %v317 = vadd.s32 %v313, 1
        %v318 = vsel %vm316, %v317, %v313
        %v319 = vadd.s32 %v314, %v318
        %v320 = vadd.s32 %v319, 536870912
        %v321 = vshrl.u32 %v320, 30
        %v322 = vshll.u32 %v321, 30
        %v323 = vsub.s32 %v319, %v322
        %vm324 = vcmp.lt.s32.totalorder %v323, 0
        %v325 = vsub.s32 0, %v323
        %v326 = vsel %vm324, %v325, %v323
        %v327 = vclz %v326
        %v328 = vsub.s32 %v327, 2
        %vm329 = vcmp.gt.s32.totalorder 0, %v328
        %v330 = vsel %vm329, 0, %v328
        %v331 = vsub.s32 32, %v330
        %v332 = vshll.u32 %v323, %v330
        %v333 = vshrl.u32 %v315, %v331
        %v334 = vor.u32 %v332, %v333
        %v335 = vsub.s32 4294967266, %v330
        %v336 = vadd.s32 %v335, 127
        %v337 = vshll.u32 %v336, 23
        %v338 = vor.u32 4788187, %v337
        %v339 = vand.u32 2147483647, %v338
        %v341 = vcvt.s32.f32 %v334
        %v342 = vmul.f32 %v341, %v339
        %v343 = vxor.u32 %v342, 2147483648
        %v344 = vsel %vm261, %v343, %v342
        %v345 = vsub.s32 4, %v321
        %v346 = vsel %vm261, %v345, %v321
        %v347 = vsel %vm260, %v154, %v344
        %v348 = vsel %vm260, 0, %v346
        %v349 = vcosq.f32.pop %v347
        %v350 = vsinq.f32.pop %v347
        %vm351 = vweird.f32 %v154
        %v352 = vand.u32 %v348, 3
        %vm353 = vcmp.lt.s32.totalorder %v352, 2
        %vm354 = vcmp.eq.s32.totalorder %v352, 0
        %v355 = vxor.u32 %v350, 2147483648
        %v356 = vsel %vm354, %v349, %v355
        %vm357 = vcmp.eq.s32.totalorder %v352, 2
        %v358 = vxor.u32 %v349, 2147483648
        %v359 = vsel %vm357, %v358, %v350
        %v360 = vsel %vm353, %v356, %v359
        %v361 = vsel %vm351, nan, %v360
        %v363 = vcombine.high %v258, %v258
        %365 = vst [vmem:[%s150] sm:$0xf] %v258
        %366 = vst [vmem:[%s150 + $0x8] sm:$0xf] %v363
        %v368 = vcombine.high %v361, %v361
        %370 = vst [vmem:[%s150 + $0x10] sm:$0xf] %v361
        %371 = vst [vmem:[%s150 + $0x18] sm:$0xf] %v368
        %v372 = vmul.f32 %v258, 2.0
        %v373 = vmul.f32 %v372, %v361
        %v374 = vmul.f32 %v372, %v258
        %v375 = vsub.f32 1.0, %v374
        %v377 = vcombine.low %v373, %v373
        %379 = vst [vmem:[%s150] sm:$0xf0] %v377
        %380 = vst [vmem:[%s150 + $0x8] sm:$0xf0] %v373
        %v382 = vcombine.low %v375, %v375
        %384 = vst [vmem:[%s150 + $0x10] sm:$0xf0] %v382
        %385 = vst [vmem:[%s150 + $0x18] sm:$0xf0] %v375
        %s386 = sand.u32 %s68, 1
        %s387 = scalar_lea.sflag [#allocation4], %s386
        %s388 = sand.u32 %s68, 1
        %s389 = smul.addr %s388, 32
        %s390 = scalar_lea.vmem [#allocation5], %s389
        // Predicated region
        $region29: #{tpu_custom_call.1} parent=23 // pred_check
          %p391 = pneg %p78
        $region30: #{tpu_custom_call.1} parent=23 // pred_check_branch
          %393 = sbr.rel (%p391) target = $region32
        $region31: #{tpu_custom_call.1} parent=23 // pred_region
          %s394 = smul.u32 2, %s23
          %s396 = ssub.s32 512, 512
          %397 = vsyncadd %s387, %s396
          %s398 = smul.addr %s22, 4
          %s399 = sadd.s32 %s394, %s398
          %s400 = smul.addr %s399, 128
          %s401 = scalar_lea.hbm %s1, %s400
          %s402 = sshll.u32 %s390, 4
          %s403 = int_to_ptr.vmem [resolvable:$true] %s402
          %408 = dma.vmem_to_hbm [thread:$0]  %s403, 512, %s401, %s387, 256, 256, 16
        $region32: #{tpu_custom_call.1} parent=23 // pred_fallthru
          _
      $region24: #{tpu_custom_call.1} parent=5 // pred_fallthru
        _
      %p409 = scmp.le.s32.totalorder 2, %s13
      // Predicated region
      $region33: #{tpu_custom_call.1} parent=5 // pred_check
        %p410 = pneg %p409
      $region34: #{tpu_custom_call.1} parent=5 // pred_check_branch
        %412 = sbr.rel (%p410) target = $region36
      $region35: #{tpu_custom_call.1} parent=5 // pred_region
        %s413 = ssub.s32 %s13, 2
        // Predicated region
        $region37: #{tpu_custom_call.1} parent=35 // pred_check
          %p414 = pneg %p84
        $region38: #{tpu_custom_call.1} parent=35 // pred_check_branch
          %416 = sbr.rel (%p414) target = $region40
        $region39: #{tpu_custom_call.1} parent=35 // pred_region
          %s417 = sand.u32 %s69, 1
          %s418 = scalar_lea.sflag [#allocation4], %s417
          %s419 = sand.u32 %s69, 1
          %s420 = smul.addr %s419, 32
          %s421 = scalar_lea.vmem [#allocation5], %s420
          %422 = dma.done %s418, 512
        $region40: #{tpu_custom_call.1} parent=35 // pred_fallthru
          _
      $region36: #{tpu_custom_call.1} parent=5 // pred_fallthru
        _
    $region6: #{tpu_custom_call.1} parent=1 // loop_footer
      %s17 = sadd.s32 1, %s13
    $region7: #{tpu_custom_call.1} parent=1 // loop_footer_branch
      %12 = sbr.rel target = $region3
    $region8: #{tpu_custom_call.1} parent=1 // loop_exit
      _
    %423 = vsyncpa [#allocation3], 1
    %s424 = scalar_lea.sflag [#allocation3], 1
    %425 = vsyncpa %s424, 1
    %426 = vsyncpa [#allocation4], 1
    %s427 = scalar_lea.sflag [#allocation4], 1
    %428 = vsyncpa %s427, 1

</llo_original>
